<compile_context>
chip_gen: v7x
topology: tpu7x:2x2x1
jax: 0.10.0
libtpu: 0.0.40
codegen_flags: <defaults>
</compile_context>

<pallas_src>
import jax
import jax.numpy as jnp
from jax.experimental import pallas as pl
from jax.experimental.pallas import tpu as pltpu


_MAX_LANE_TILE = 32768  # lanes per block; multiple of 128


def _lorenz_kernel(y_ref, f_ref):
    # y_ref, f_ref: (3, TL) tiles in VMEM (native dtype).
    y = y_ref[...].astype(jnp.float32)          # (3, TL), compute in f32
    y1 = y[0:1, :]
    y2 = y[1:2, :]
    y3 = y[2:3, :]
    out_dt = f_ref.dtype
    # Direct per-row stores (no sublane concatenate).
    f_ref[0:1, :] = (10.0 * (y2 - y1)).astype(out_dt)
    f_ref[1:2, :] = (y1 * (28.0 - y3) - y2).astype(out_dt)
    f_ref[2:3, :] = (y1 * y2 - (8.0 / 3.0) * y3).astype(out_dt)


def lorenz_rhs_3n(y3n):
    """Core Pallas RHS on component-major state of shape (3, N).

    Prefer this inside ODE solver loops: keep the state in (3, N) layout across
    time steps so no per-step transposes are needed.
    """
    three, n = y3n.shape
    assert three == 3, "expected component-major state of shape (3, N)"
    dtype = y3n.dtype

    # Pad lanes up so every block is a full (3, TL) tile.
    n_pad = ((n + 127) // 128) * 128
    tl = min(_MAX_LANE_TILE, n_pad)
    n_pad = ((n_pad + tl - 1) // tl) * tl
    if n_pad != n:
        y3n = jnp.pad(y3n, ((0, 0), (0, n_pad - n)))

    f3n = pl.pallas_call(
        _lorenz_kernel,
        out_shape=jax.ShapeDtypeStruct((3, n_pad), dtype),
        grid=(n_pad // tl,),
        in_specs=[pl.BlockSpec((3, tl), lambda i: (0, i))],
        out_specs=pl.BlockSpec((3, tl), lambda i: (0, i)),
        compiler_params=pltpu.CompilerParams(
            dimension_semantics=("parallel",)),
    )(y3n)

    if n_pad != n:
        f3n = f3n[:, :n]
    return f3n


def lorenz_forward(t, y):
    """Pallas equivalent of Lorenz.forward(t, y): returns F(y), same shape/dtype.

    `t` is accepted for API parity with the PyTorch module but unused.
    NOTE: the (..., 3) <-> (3, N) layout change here is a per-call XLA transpose;
    for an ODE loop, call `lorenz_rhs_3n` on component-major state instead.
    """
    del t
    orig_shape = y.shape
    assert orig_shape[-1] == 3, "Lorenz state must have last dim == 3"

    y3n = y.reshape(-1, 3).T          # (3, N), native dtype (no forced f32 cast)
    f3n = lorenz_rhs_3n(y3n)
    return f3n.T.reshape(orig_shape)


def _lorenz_reference(y):
    y1, y2, y3 = y[..., 0], y[..., 1], y[..., 2]
    f0 = 10.0 * (y2 - y1)
    f1 = y1 * (28.0 - y3) - y2
    f2 = y1 * y2 - (8.0 / 3.0) * y3
    return jnp.stack([f0, f1, f2], axis=-1).astype(y.dtype)


if __name__ == "__main__":
    key = jax.random.PRNGKey(0)
    # Small batch of Lorenz states: (batch=2, seq=8, state=3)
    y = jax.random.normal(key, (2, 8, 3), dtype=jnp.float32)
    t = jnp.float32(0.0)  # unused, kept for signature parity

    out = lorenz_forward(t, y)
    out = jax.block_until_ready(out)

    ref = _lorenz_reference(y)
    assert out.shape == y.shape and out.dtype == y.dtype
    assert jnp.allclose(out, ref, atol=1e-5, rtol=1e-5)

    # Also exercise the component-major fast path (what an ODE loop should use).
    y3n = y.reshape(-1, 3).T
    out3n = jax.block_until_ready(lorenz_rhs_3n(y3n))
    assert jnp.allclose(out3n.T.reshape(y.shape), ref, atol=1e-5, rtol=1e-5)

    print("KERNEL_OK")
</pallas_src>

<mosaic_0001>
module attributes {stable_mosaic.version = 11 : i64} {
  func.func @_lorenz_kernel(%arg0: i32, %arg1: memref<3x128xf32, #tpu.memory_space<vmem>>, %arg2: memref<3x128xf32, #tpu.memory_space<vmem>>) attributes {dimension_semantics = [#tpu.dimension_semantics<parallel>], iteration_bounds = array<i64: 1>, scalar_prefetch = 0 : i64, scratch_operands = 0 : i64, tpu.core_type = #tpu.core_type<tc>, window_params = [{transform_indices = @transform_0, window_bounds = array<i64: 3, 128>}, {transform_indices = @transform_1, window_bounds = array<i64: 3, 128>}]} {
    %c0 = arith.constant 0 : index
    %c0_0 = arith.constant 0 : index
    %0 = vector.load %arg1[%c0, %c0_0] : memref<3x128xf32, #tpu.memory_space<vmem>>, vector<3x128xf32>
    %1 = vector.extract_strided_slice %0 {offsets = [0, 0], sizes = [1, 128], strides = [1, 1]} : vector<3x128xf32> to vector<1x128xf32>
    %2 = vector.extract_strided_slice %0 {offsets = [1, 0], sizes = [1, 128], strides = [1, 1]} : vector<3x128xf32> to vector<1x128xf32>
    %3 = vector.extract_strided_slice %0 {offsets = [2, 0], sizes = [1, 128], strides = [1, 1]} : vector<3x128xf32> to vector<1x128xf32>
    %4 = arith.subf %2, %1 : vector<1x128xf32>
    %cst = arith.constant 1.000000e+01 : f32
    %5 = vector.broadcast %cst : f32 to vector<1x128xf32>
    %6 = arith.mulf %5, %4 : vector<1x128xf32>
    %c0_1 = arith.constant 0 : index
    %c0_2 = arith.constant 0 : index
    %7 = vector.load %arg2[%c0_1, %c0_2] : memref<3x128xf32, #tpu.memory_space<vmem>>, vector<1x128xf32>
    tpu.vector_store %arg2[%c0_1, %c0_2], %6 {strides = array<i32>} : memref<3x128xf32, #tpu.memory_space<vmem>>, vector<1x128xf32>,
    %cst_3 = arith.constant 2.800000e+01 : f32
    %8 = vector.broadcast %cst_3 : f32 to vector<1x128xf32>
    %9 = arith.subf %8, %3 : vector<1x128xf32>
    %10 = arith.mulf %1, %9 : vector<1x128xf32>
    %11 = arith.subf %10, %2 : vector<1x128xf32>
    %c1 = arith.constant 1 : index
    %c0_4 = arith.constant 0 : index
    %12 = vector.load %arg2[%c1, %c0_4] : memref<3x128xf32, #tpu.memory_space<vmem>>, vector<1x128xf32>
    tpu.vector_store %arg2[%c1, %c0_4], %11 {strides = array<i32>} : memref<3x128xf32, #tpu.memory_space<vmem>>, vector<1x128xf32>,
    %13 = arith.mulf %1, %2 : vector<1x128xf32>
    %cst_5 = arith.constant 2.66666675 : f32
    %14 = vector.broadcast %cst_5 : f32 to vector<1x128xf32>
    %15 = arith.mulf %14, %3 : vector<1x128xf32>
    %16 = arith.subf %13, %15 : vector<1x128xf32>
    %c2 = arith.constant 2 : index
    %c0_6 = arith.constant 0 : index
    %17 = vector.load %arg2[%c2, %c0_6] : memref<3x128xf32, #tpu.memory_space<vmem>>, vector<1x128xf32>
    tpu.vector_store %arg2[%c2, %c0_6], %16 {strides = array<i32>} : memref<3x128xf32, #tpu.memory_space<vmem>>, vector<1x128xf32>,
    return
  }
  func.func @transform_0(%arg0: i32) -> (i32, i32) {
    %c0_i32 = arith.constant 0 : i32
    %c0_i32_0 = arith.constant 0 : i32
    return %c0_i32, %arg0 : i32, i32
  }
  func.func @transform_1(%arg0: i32) -> (i32, i32) {
    %c0_i32 = arith.constant 0 : i32
    %c0_i32_0 = arith.constant 0 : i32
    return %c0_i32, %arg0 : i32, i32
  }
}

</mosaic_0001>

<llo_original>
// kernel: tpu_custom_call.1
$region0: #{tpu_custom_call.1}
  #allocation0 [shape = 'u32[]', space=smem, size = 0x4, offset = 0x4, fixed_abs, tag = 'smem constant byte address 0x4 - core index']
  #allocation1 [shape = 'u32[144,128]{1,0:T(1,128)}', space=vmem, size = 0x12000, scoped, tag = 'internal scratch']
  %s0 = inlined_call_operand.hbm [shape: f32[3,128], index: 0, kind: input, shape index: {}]
  %s1 = inlined_call_operand.hbm [shape: f32[3,128], index: 1, kind: output, shape index: {}]
  %s2 = sld [smem:[#allocation0]]
  $region18: #{tpu_custom_call.1} parent=0
    _
  %s4 = ssub.s32 1, %s2
  %s5 = scalar_select 0, %s4, %s2
  $region1: #{tpu_custom_call.1} parent=0
    #allocation2 [shape = 'u8[2048]{0}', space=vmem, size = 0x800, scoped, tag = 'input window, operand 0, single buffered']
    #allocation3 [shape = 's32[1]{0}', space=sflag, size = 0x4, scoped, tag = 'scoped memory for tpu_custom_call.1']
    #allocation4 [shape = 's32[1]{0}', space=sflag, size = 0x4, scoped, tag = 'scoped memory for tpu_custom_call.1']
    #allocation5 [shape = 'u8[2048]{0}', space=vmem, size = 0x800, scoped, tag = 'output window, operand 0, single buffered']
    %6 = vsyncpa [#allocation3], 0
    %7 = vsyncpa [#allocation4], 0
    // Predicated region
    $region2: #{tpu_custom_call.1} parent=1 // pred_check
      _
    $region3: #{tpu_custom_call.1} parent=1 // pred_check_branch
      %9 = sbr.rel (0) target = $region5
    $region4: #{tpu_custom_call.1} parent=1 // pred_region
      %s11 = ssub.s32 64, 64
      %12 = vsyncadd [#allocation3], %s11
      %s14 = sshll.u32 [#allocation2], 4
      %s15 = int_to_ptr.vmem [resolvable:$true] %s14
      %17 = dma.hbm_to_vmem [thread:$0]  %s0, 64, %s15, [#allocation3]
    $region5: #{tpu_custom_call.1} parent=1 // pred_fallthru
      _
    // Predicated region
    $region6: #{tpu_custom_call.1} parent=1 // pred_check
      _
    $region7: #{tpu_custom_call.1} parent=1 // pred_check_branch
      %19 = sbr.rel (0) target = $region9
    $region8: #{tpu_custom_call.1} parent=1 // pred_region
      %20 = dma.done [#allocation3], 64
    $region9: #{tpu_custom_call.1} parent=1 // pred_fallthru
      _
    %v21 = vld [vmem:[#allocation2] sm:$0x7]
    %v23 = vrot.slane %v21, 7
    %v25 = vsub.f32 %v21, %v23
    %v26 = vmul.f32 %v25, 10.0
    %27 = vst [vmem:[#allocation5 - $0x1] sm:$0x2] %v26
    %v28 = vsub.f32 28.0, %v21
    %v30 = vrot.slane %v28, 2
    %v32 = vmul.f32 %v21, %v30
    %v33 = vrot.slane %v21, 1
    %v35 = vsub.f32 %v32, %v33
    %36 = vst [vmem:[#allocation5 + $0x1] sm:$0x1] %v35
    %v37 = vmul.f32 %v21, %v33
    %v38 = vmul.f32 %v21, 2.6666667
    %v40 = vrot.slane %v38, 2
    %v42 = vsub.f32 %v37, %v40
    %43 = vst [vmem:[#allocation5 + $0x2] sm:$0x1] %v42
    // Predicated region
    $region10: #{tpu_custom_call.1} parent=1 // pred_check
      _
    $region11: #{tpu_custom_call.1} parent=1 // pred_check_branch
      %45 = sbr.rel (0) target = $region13
    $region12: #{tpu_custom_call.1} parent=1 // pred_region
      %s47 = ssub.s32 64, 64
      %48 = vsyncadd [#allocation4], %s47
      %s50 = sshll.u32 [#allocation5], 4
      %s51 = int_to_ptr.vmem [resolvable:$true] %s50
      %53 = dma.vmem_to_hbm [thread:$0]  %s51, 64, %s1, [#allocation4]
    $region13: #{tpu_custom_call.1} parent=1 // pred_fallthru
      _
    // Predicated region
    $region14: #{tpu_custom_call.1} parent=1 // pred_check
      _
    $region15: #{tpu_custom_call.1} parent=1 // pred_check_branch
      %55 = sbr.rel (0) target = $region17
    $region16: #{tpu_custom_call.1} parent=1 // pred_region
      %56 = dma.done [#allocation4], 64
    $region17: #{tpu_custom_call.1} parent=1 // pred_fallthru
      _
    %57 = vsyncpa [#allocation3], 1
    %58 = vsyncpa [#allocation4], 1

</llo_original>
